<compile_context>
chip_gen: v7x
topology: tpu7x:2x2x1
jax: 0.10.0
libtpu: 0.0.40
codegen_flags: <defaults>
</compile_context>

<pallas_src>
import math
import functools

import jax
import jax.numpy as jnp
from jax.experimental import pallas as pl
from jax.experimental.pallas import tpu as pltpu


def _rnn_seq_kernel(x_ref, wt_ref, ut_ref, vwt_ref, vb_ref, out_ref, hall_ref,
                    *, T, B):
    """Full-sequence RNN in one invocation (everything resident in VMEM).

    x_ref   : (T*B, In)  time-major inputs; rows [t*B:(t+1)*B] are timestep t
    wt_ref  : (In, K)    pre-transposed input weight  (W.T)
    ut_ref  : (K, K)     pre-transposed recurrent weight (U.T)
    vwt_ref : (K, M)     pre-transposed output weight (Vw.T)
    vb_ref  : (1, M)     output bias
    out_ref : (T*B, M)   logits, time-major
    hall_ref: (T*B, K)   VMEM scratch holding all hidden states
    """
    # Hoisted input projection: one matmul covering every timestep.
    xw = jnp.dot(x_ref[...].astype(jnp.float32), wt_ref[...],
                 preferred_element_type=jnp.float32)          # (T*B, K)

    ut = ut_ref[...]                                          # (K, K), loaded once
    K = ut.shape[0]
    h = jnp.zeros((B, K), jnp.float32)

    # Serial recurrence: only the genuinely sequential part stays in the loop.
    # T is small and static -> fully unrolled at trace time.
    for t in range(T):
        h = jnp.tanh(xw[t * B:(t + 1) * B, :]
                     + jnp.dot(h, ut, preferred_element_type=jnp.float32))
        hall_ref[t * B:(t + 1) * B, :] = h

    # Hoisted output projection: one matmul + a single store for the sequence.
    out = (jnp.dot(hall_ref[...], vwt_ref[...],
                   preferred_element_type=jnp.float32)
           + vb_ref[...])
    out_ref[...] = out.astype(out_ref.dtype)


def model_forward(inputs, params):
    """inputs: (B, T, m+1) float32 (PyTorch layout).  Returns (B, T, m)."""
    W, U, Vw, Vb = params["W"], params["U"], params["Vw"], params["Vb"]
    B, T, In = inputs.shape
    K = W.shape[0]
    M = Vw.shape[0]
    assert W.shape == (K, In) and U.shape == (K, K) and Vw.shape == (M, K)

    # Time-major 2-D slab: rows [t*B:(t+1)*B] correspond to inputs[:, t, :].
    x2d = jnp.transpose(inputs, (1, 0, 2)).reshape(T * B, In).astype(jnp.float32)

    # Pre-transpose weights once on the host side (no in-kernel transposes).
    wt = jnp.transpose(W)      # (In, K)
    ut = jnp.transpose(U)      # (K, K)
    vwt = jnp.transpose(Vw)    # (K, M)
    vb2d = Vb.reshape(1, M)

    kernel = functools.partial(_rnn_seq_kernel, T=T, B=B)

    out2d = pl.pallas_call(
        kernel,
        out_shape=jax.ShapeDtypeStruct((T * B, M), jnp.float32),
        in_specs=[pl.BlockSpec(memory_space=pltpu.MemorySpace.VMEM)] * 5,
        out_specs=pl.BlockSpec(memory_space=pltpu.MemorySpace.VMEM),
        scratch_shapes=[pltpu.VMEM((T * B, K), jnp.float32)],
    )(x2d, wt, ut, vwt, vb2d)

    # (T*B, M) -> (T, B, M) -> (B, T, M) to match the PyTorch output layout.
    return jnp.transpose(out2d.reshape(T, B, M), (1, 0, 2))


def init_params(key, m, k):
    """Deterministic init matching the PyTorch shapes/bounds (uniform(-b, b))."""
    In = m + 1
    b_rnn = math.sqrt(1.0 / k)   # RNN: k = 1/out_features
    b_lin = math.sqrt(1.0 / k)   # nn.Linear(k, m): bound = 1/sqrt(in_features)
    k0, k1, k2, k3 = jax.random.split(key, 4)
    return {
        "W":  jax.random.uniform(k0, (k, In), jnp.float32, -b_rnn, b_rnn),
        "U":  jax.random.uniform(k1, (k, k),  jnp.float32, -b_rnn, b_rnn),
        "Vw": jax.random.uniform(k2, (m, k),  jnp.float32, -b_lin, b_lin),
        "Vb": jax.random.uniform(k3, (m,),    jnp.float32, -b_lin, b_lin),
    }


def _reference_forward(inputs, params):
    """Pure-JAX reference replicating the PyTorch loop (RNN architecture)."""
    W, U, Vw, Vb = params["W"], params["U"], params["Vw"], params["Vb"]
    B, T, _ = inputs.shape
    K = W.shape[0]

    def step(h, x_t):
        h = jnp.tanh(x_t @ W.T + h @ U.T)
        return h, h @ Vw.T + Vb

    h0 = jnp.zeros((B, K), jnp.float32)
    _, outs = jax.lax.scan(step, h0, jnp.transpose(inputs, (1, 0, 2)))
    return jnp.transpose(outs, (1, 0, 2))


if __name__ == "__main__":
    m, k = 8, 32          # Model(m, k, RNN): in_features = m+1 = 9, hidden = k
    B, T = 2, 8           # batch=2, seq=8

    key = jax.random.PRNGKey(0)
    kp, kx = jax.random.split(key)
    params = init_params(kp, m, k)
    inputs = jax.random.normal(kx, (B, T, m + 1), jnp.float32)

    out = jax.block_until_ready(model_forward(inputs, params))
    ref = _reference_forward(inputs, params)

    assert out.shape == (B, T, m)
    assert jnp.allclose(out, ref, atol=1e-5, rtol=1e-5), "mismatch vs reference"

    print("KERNEL_OK")
</pallas_src>

<mosaic_0001>
module attributes {stable_mosaic.version = 11 : i64} {
  func.func @_rnn_seq_kernel(%arg0: memref<16x9xf32, #tpu.memory_space<vmem>>, %arg1: memref<9x32xf32, #tpu.memory_space<vmem>>, %arg2: memref<32x32xf32, #tpu.memory_space<vmem>>, %arg3: memref<32x8xf32, #tpu.memory_space<vmem>>, %arg4: memref<1x8xf32, #tpu.memory_space<vmem>>, %arg5: memref<16x8xf32, #tpu.memory_space<vmem>>, %arg6: memref<16x32xf32, #tpu.memory_space<vmem>>) attributes {dimension_semantics = [], scalar_prefetch = 0 : i64, scratch_operands = 1 : i64, tpu.core_type = #tpu.core_type<tc>} {
    %c0 = arith.constant 0 : index
    %c0_0 = arith.constant 0 : index
    %0 = vector.load %arg0[%c0, %c0_0] : memref<16x9xf32, #tpu.memory_space<vmem>>, vector<16x9xf32>
    %c0_1 = arith.constant 0 : index
    %c0_2 = arith.constant 0 : index
    %1 = vector.load %arg1[%c0_1, %c0_2] : memref<9x32xf32, #tpu.memory_space<vmem>>, vector<9x32xf32>
    %cst = arith.constant dense<0.000000e+00> : vector<16x32xf32>
    %2 = tpu.matmul %0, %1, %cst {dimension_numbers = #tpu.dot_dimension_numbers<[1], [0], [0], [1], [0, 0, 1, 1], [], []>} : vector<16x9xf32>, vector<9x32xf32>, vector<16x32xf32> -> vector<16x32xf32>
    %c0_3 = arith.constant 0 : index
    %c0_4 = arith.constant 0 : index
    %3 = vector.load %arg2[%c0_3, %c0_4] : memref<32x32xf32, #tpu.memory_space<vmem>>, vector<32x32xf32>
    %cst_5 = arith.constant 0.000000e+00 : f32
    %4 = vector.broadcast %cst_5 : f32 to vector<2x32xf32>
    %5 = vector.extract_strided_slice %2 {offsets = [0, 0], sizes = [2, 32], strides = [1, 1]} : vector<16x32xf32> to vector<2x32xf32>
    %cst_6 = arith.constant dense<0.000000e+00> : vector<2x32xf32>
    %6 = tpu.matmul %4, %3, %cst_6 {dimension_numbers = #tpu.dot_dimension_numbers<[1], [0], [0], [1], [0, 0, 1, 1], [], []>} : vector<2x32xf32>, vector<32x32xf32>, vector<2x32xf32> -> vector<2x32xf32>
    %7 = arith.addf %5, %6 : vector<2x32xf32>
    %8 = math.tanh %7 : vector<2x32xf32>
    %c0_7 = arith.constant 0 : index
    %c0_8 = arith.constant 0 : index
    %9 = vector.load %arg6[%c0_7, %c0_8] : memref<16x32xf32, #tpu.memory_space<vmem>>, vector<2x32xf32>
    tpu.vector_store %arg6[%c0_7, %c0_8], %8 {strides = array<i32>} : memref<16x32xf32, #tpu.memory_space<vmem>>, vector<2x32xf32>,
    %10 = vector.extract_strided_slice %2 {offsets = [2, 0], sizes = [2, 32], strides = [1, 1]} : vector<16x32xf32> to vector<2x32xf32>
    %cst_9 = arith.constant dense<0.000000e+00> : vector<2x32xf32>
    %11 = tpu.matmul %8, %3, %cst_9 {dimension_numbers = #tpu.dot_dimension_numbers<[1], [0], [0], [1], [0, 0, 1, 1], [], []>} : vector<2x32xf32>, vector<32x32xf32>, vector<2x32xf32> -> vector<2x32xf32>
    %12 = arith.addf %10, %11 : vector<2x32xf32>
    %13 = math.tanh %12 : vector<2x32xf32>
    %c2 = arith.constant 2 : index
    %c0_10 = arith.constant 0 : index
    %14 = vector.load %arg6[%c2, %c0_10] : memref<16x32xf32, #tpu.memory_space<vmem>>, vector<2x32xf32>
    tpu.vector_store %arg6[%c2, %c0_10], %13 {strides = array<i32>} : memref<16x32xf32, #tpu.memory_space<vmem>>, vector<2x32xf32>,
    %15 = vector.extract_strided_slice %2 {offsets = [4, 0], sizes = [2, 32], strides = [1, 1]} : vector<16x32xf32> to vector<2x32xf32>
    %cst_11 = arith.constant dense<0.000000e+00> : vector<2x32xf32>
    %16 = tpu.matmul %13, %3, %cst_11 {dimension_numbers = #tpu.dot_dimension_numbers<[1], [0], [0], [1], [0, 0, 1, 1], [], []>} : vector<2x32xf32>, vector<32x32xf32>, vector<2x32xf32> -> vector<2x32xf32>
    %17 = arith.addf %15, %16 : vector<2x32xf32>
    %18 = math.tanh %17 : vector<2x32xf32>
    %c4 = arith.constant 4 : index
    %c0_12 = arith.constant 0 : index
    %19 = vector.load %arg6[%c4, %c0_12] : memref<16x32xf32, #tpu.memory_space<vmem>>, vector<2x32xf32>
    tpu.vector_store %arg6[%c4, %c0_12], %18 {strides = array<i32>} : memref<16x32xf32, #tpu.memory_space<vmem>>, vector<2x32xf32>,
    %20 = vector.extract_strided_slice %2 {offsets = [6, 0], sizes = [2, 32], strides = [1, 1]} : vector<16x32xf32> to vector<2x32xf32>
    %cst_13 = arith.constant dense<0.000000e+00> : vector<2x32xf32>
    %21 = tpu.matmul %18, %3, %cst_13 {dimension_numbers = #tpu.dot_dimension_numbers<[1], [0], [0], [1], [0, 0, 1, 1], [], []>} : vector<2x32xf32>, vector<32x32xf32>, vector<2x32xf32> -> vector<2x32xf32>
    %22 = arith.addf %20, %21 : vector<2x32xf32>
    %23 = math.tanh %22 : vector<2x32xf32>
    %c6 = arith.constant 6 : index
    %c0_14 = arith.constant 0 : index
    %24 = vector.load %arg6[%c6, %c0_14] : memref<16x32xf32, #tpu.memory_space<vmem>>, vector<2x32xf32>
    tpu.vector_store %arg6[%c6, %c0_14], %23 {strides = array<i32>} : memref<16x32xf32, #tpu.memory_space<vmem>>, vector<2x32xf32>,
    %25 = vector.extract_strided_slice %2 {offsets = [8, 0], sizes = [2, 32], strides = [1, 1]} : vector<16x32xf32> to vector<2x32xf32>
    %cst_15 = arith.constant dense<0.000000e+00> : vector<2x32xf32>
    %26 = tpu.matmul %23, %3, %cst_15 {dimension_numbers = #tpu.dot_dimension_numbers<[1], [0], [0], [1], [0, 0, 1, 1], [], []>} : vector<2x32xf32>, vector<32x32xf32>, vector<2x32xf32> -> vector<2x32xf32>
    %27 = arith.addf %25, %26 : vector<2x32xf32>
    %28 = math.tanh %27 : vector<2x32xf32>
    %c8 = arith.constant 8 : index
    %c0_16 = arith.constant 0 : index
    %29 = vector.load %arg6[%c8, %c0_16] : memref<16x32xf32, #tpu.memory_space<vmem>>, vector<2x32xf32>
    tpu.vector_store %arg6[%c8, %c0_16], %28 {strides = array<i32>} : memref<16x32xf32, #tpu.memory_space<vmem>>, vector<2x32xf32>,
    %30 = vector.extract_strided_slice %2 {offsets = [10, 0], sizes = [2, 32], strides = [1, 1]} : vector<16x32xf32> to vector<2x32xf32>
    %cst_17 = arith.constant dense<0.000000e+00> : vector<2x32xf32>
    %31 = tpu.matmul %28, %3, %cst_17 {dimension_numbers = #tpu.dot_dimension_numbers<[1], [0], [0], [1], [0, 0, 1, 1], [], []>} : vector<2x32xf32>, vector<32x32xf32>, vector<2x32xf32> -> vector<2x32xf32>
    %32 = arith.addf %30, %31 : vector<2x32xf32>
    %33 = math.tanh %32 : vector<2x32xf32>
    %c10 = arith.constant 10 : index
    %c0_18 = arith.constant 0 : index
    %34 = vector.load %arg6[%c10, %c0_18] : memref<16x32xf32, #tpu.memory_space<vmem>>, vector<2x32xf32>
    tpu.vector_store %arg6[%c10, %c0_18], %33 {strides = array<i32>} : memref<16x32xf32, #tpu.memory_space<vmem>>, vector<2x32xf32>,
    %35 = vector.extract_strided_slice %2 {offsets = [12, 0], sizes = [2, 32], strides = [1, 1]} : vector<16x32xf32> to vector<2x32xf32>
    %cst_19 = arith.constant dense<0.000000e+00> : vector<2x32xf32>
    %36 = tpu.matmul %33, %3, %cst_19 {dimension_numbers = #tpu.dot_dimension_numbers<[1], [0], [0], [1], [0, 0, 1, 1], [], []>} : vector<2x32xf32>, vector<32x32xf32>, vector<2x32xf32> -> vector<2x32xf32>
    %37 = arith.addf %35, %36 : vector<2x32xf32>
    %38 = math.tanh %37 : vector<2x32xf32>
    %c12 = arith.constant 12 : index
    %c0_20 = arith.constant 0 : index
    %39 = vector.load %arg6[%c12, %c0_20] : memref<16x32xf32, #tpu.memory_space<vmem>>, vector<2x32xf32>
    tpu.vector_store %arg6[%c12, %c0_20], %38 {strides = array<i32>} : memref<16x32xf32, #tpu.memory_space<vmem>>, vector<2x32xf32>,
    %40 = vector.extract_strided_slice %2 {offsets = [14, 0], sizes = [2, 32], strides = [1, 1]} : vector<16x32xf32> to vector<2x32xf32>
    %cst_21 = arith.constant dense<0.000000e+00> : vector<2x32xf32>
    %41 = tpu.matmul %38, %3, %cst_21 {dimension_numbers = #tpu.dot_dimension_numbers<[1], [0], [0], [1], [0, 0, 1, 1], [], []>} : vector<2x32xf32>, vector<32x32xf32>, vector<2x32xf32> -> vector<2x32xf32>
    %42 = arith.addf %40, %41 : vector<2x32xf32>
    %43 = math.tanh %42 : vector<2x32xf32>
    %c14 = arith.constant 14 : index
    %c0_22 = arith.constant 0 : index
    %44 = vector.load %arg6[%c14, %c0_22] : memref<16x32xf32, #tpu.memory_space<vmem>>, vector<2x32xf32>
    tpu.vector_store %arg6[%c14, %c0_22], %43 {strides = array<i32>} : memref<16x32xf32, #tpu.memory_space<vmem>>, vector<2x32xf32>,
    %c0_23 = arith.constant 0 : index
    %c0_24 = arith.constant 0 : index
    %45 = vector.load %arg6[%c0_23, %c0_24] : memref<16x32xf32, #tpu.memory_space<vmem>>, vector<16x32xf32>
    %c0_25 = arith.constant 0 : index
    %c0_26 = arith.constant 0 : index
    %46 = vector.load %arg3[%c0_25, %c0_26] : memref<32x8xf32, #tpu.memory_space<vmem>>, vector<32x8xf32>
    %cst_27 = arith.constant dense<0.000000e+00> : vector<16x8xf32>
    %47 = tpu.matmul %45, %46, %cst_27 {dimension_numbers = #tpu.dot_dimension_numbers<[1], [0], [0], [1], [0, 0, 1, 1], [], []>} : vector<16x32xf32>, vector<32x8xf32>, vector<16x8xf32> -> vector<16x8xf32>
    %c0_28 = arith.constant 0 : index
    %c0_29 = arith.constant 0 : index
    %48 = vector.load %arg4[%c0_28, %c0_29] : memref<1x8xf32, #tpu.memory_space<vmem>>, vector<1x8xf32>
    %49 = vector.broadcast %48 : vector<1x8xf32> to vector<16x8xf32>
    %50 = arith.addf %47, %49 : vector<16x8xf32>
    %c0_30 = arith.constant 0 : index
    %c0_31 = arith.constant 0 : index
    %51 = vector.load %arg5[%c0_30, %c0_31] : memref<16x8xf32, #tpu.memory_space<vmem>>, vector<16x8xf32>
    tpu.vector_store %arg5[%c0_30, %c0_31], %50 {strides = array<i32>} : memref<16x8xf32, #tpu.memory_space<vmem>>, vector<16x8xf32>,
    return
  }
}

</mosaic_0001>

<llo_original>
// kernel: tpu_custom_call.1
$region0: #{tpu_custom_call.1}
  #allocation0 [shape = 'u32[]', space=smem, size = 0x4, offset = 0x4, fixed_abs, tag = 'smem constant byte address 0x4 - core index']
  #allocation1 [shape = 'u32[144,128]{1,0:T(1,128)}', space=vmem, size = 0x12000, scoped, tag = 'internal scratch']
  #allocation2 [shape = 'f32[16,32]{1,0:T(8,128)}', space=vmem, size = 0x2000, scoped, tag = 'scratch operand']
  %s0 = inlined_call_operand.hbm [shape: f32[16,9], index: 0, kind: input, shape index: {}]
  %s1 = inlined_call_operand.hbm [shape: f32[9,32], index: 1, kind: input, shape index: {}]
  %s2 = inlined_call_operand.vmem [shape: f32[32,32], index: 2, kind: input, shape index: {}]
  %s3 = inlined_call_operand.vmem [shape: f32[32,8], index: 3, kind: input, shape index: {}]
  %s4 = inlined_call_operand.vmem [shape: f32[1,8], index: 4, kind: input, shape index: {}]
  %s5 = inlined_call_operand.vmem [shape: f32[16,8], index: 5, kind: output, shape index: {}]
  %s6 = sld [smem:[#allocation0]]
  $region38: #{tpu_custom_call.1} parent=0
    _
  %s8 = ssub.s32 1, %s6
  %s9 = scalar_select 0, %s8, %s6
  $region1: #{tpu_custom_call.1} parent=0
    #allocation3 [shape = 'u8[8192]{0}', space=vmem, size = 0x2000, scoped, tag = 'input window, operand 0, single buffered']
    #allocation4 [shape = 's32[1]{0}', space=sflag, size = 0x4, scoped, tag = 'scoped memory for tpu_custom_call.1']
    #allocation5 [shape = 'u8[8192]{0}', space=vmem, size = 0x2000, scoped, tag = 'input window, operand 1, single buffered']
    #allocation6 [shape = 's32[1]{0}', space=sflag, size = 0x4, scoped, tag = 'scoped memory for tpu_custom_call.1']
    %10 = vsyncpa [#allocation4], 0
    %11 = vsyncpa [#allocation6], 0
    // Predicated region
    $region2: #{tpu_custom_call.1} parent=1 // pred_check
      _
    $region3: #{tpu_custom_call.1} parent=1 // pred_check_branch
      %13 = sbr.rel (0) target = $region5
    $region4: #{tpu_custom_call.1} parent=1 // pred_region
      %s15 = ssub.s32 256, 256
      %16 = vsyncadd [#allocation4], %s15
      %s17 = sshll.u32 [#allocation3], 4
      %s18 = int_to_ptr.vmem [resolvable:$true] %s17
      %23 = dma.hbm_to_vmem [thread:$0]  %s0, 256, %s18, [#allocation4], 128, 128, 8
    $region5: #{tpu_custom_call.1} parent=1 // pred_fallthru
      _
    // Predicated region
    $region6: #{tpu_custom_call.1} parent=1 // pred_check
      _
    $region7: #{tpu_custom_call.1} parent=1 // pred_check_branch
      %25 = sbr.rel (0) target = $region9
    $region8: #{tpu_custom_call.1} parent=1 // pred_region
      %s27 = ssub.s32 256, 256
      %28 = vsyncadd [#allocation6], %s27
      %s29 = sshll.u32 [#allocation5], 4
      %s30 = int_to_ptr.vmem [resolvable:$true] %s29
      %35 = dma.hbm_to_vmem [thread:$0]  %s1, 256, %s30, [#allocation6], 128, 128, 8
    $region9: #{tpu_custom_call.1} parent=1 // pred_fallthru
      _
    // Predicated region
    $region10: #{tpu_custom_call.1} parent=1 // pred_check
      _
    $region11: #{tpu_custom_call.1} parent=1 // pred_check_branch
      %37 = sbr.rel (0) target = $region13
    $region12: #{tpu_custom_call.1} parent=1 // pred_region
      _
    $region13: #{tpu_custom_call.1} parent=1 // pred_fallthru
      _
    // Predicated region
    $region14: #{tpu_custom_call.1} parent=1 // pred_check
      _
    $region15: #{tpu_custom_call.1} parent=1 // pred_check_branch
      %39 = sbr.rel (0) target = $region17
    $region16: #{tpu_custom_call.1} parent=1 // pred_region
      _
    $region17: #{tpu_custom_call.1} parent=1 // pred_fallthru
      _
    // Predicated region
    $region18: #{tpu_custom_call.1} parent=1 // pred_check
      _
    $region19: #{tpu_custom_call.1} parent=1 // pred_check_branch
      %41 = sbr.rel (0) target = $region21
    $region20: #{tpu_custom_call.1} parent=1 // pred_region
      _
    $region21: #{tpu_custom_call.1} parent=1 // pred_fallthru
      _
    // Predicated region
    $region22: #{tpu_custom_call.1} parent=1 // pred_check
      _
    $region23: #{tpu_custom_call.1} parent=1 // pred_check_branch
      %43 = sbr.rel (0) target = $region25
    $region24: #{tpu_custom_call.1} parent=1 // pred_region
      %44 = dma.done [#allocation4], 256
    $region25: #{tpu_custom_call.1} parent=1 // pred_fallthru
      _
    // Predicated region
    $region26: #{tpu_custom_call.1} parent=1 // pred_check
      _
    $region27: #{tpu_custom_call.1} parent=1 // pred_check_branch
      %46 = sbr.rel (0) target = $region29
    $region28: #{tpu_custom_call.1} parent=1 // pred_region
      %47 = dma.done [#allocation6], 256
    $region29: #{tpu_custom_call.1} parent=1 // pred_fallthru
      _
    %v48 = vld [vmem:[#allocation3] sm:$0xff]
    %v49 = vld [vmem:[#allocation3 + $0x8] sm:$0xff]
    %v50 = vld [vmem:[#allocation5] sm:$0xff]
    %v51 = vld [vmem:[#allocation5 + $0x8] sm:$0x1]
    %vm52 = vcmask 72704
    %v54 = vsel %vm52, %v48, 0
    %v57 = vsel %vm52, %v49, 0
    %vm59 = vcmask 1040384
    %v61 = vsel %vm59, %v51, 0
    %63 = vmatprep.subr.mxu0 0.0
    %64 = vmatpush1.msra.mxu0 %v50
    %65 = vmatprep.subr.mxu0 0.0
    %66 = vmatpush1.msra.mxu0 %v61
    %67 = vmatprep.subr.mxu0 0.0
    %68 = vmatpush1.msra.mxu0 0.0
    %69 = vmatprep.subr.mxu0 0.0
    %70 = vmatpush1.msra.mxu0 0.0
    %71 = vmatprep.subr.mxu0 0.0
    %72 = vmatpush1.msra.mxu0 0.0
    %73 = vmatprep.subr.mxu0 0.0
    %74 = vmatpush1.msra.mxu0 0.0
    %75 = vmatprep.subr.mxu0 0.0
    %76 = vmatpush1.msra.mxu0 0.0
    %77 = vmatprep.subr.mxu0 0.0
    %78 = vmatpush1.msra.mxu0 0.0
    %79 = vmatprep.subr.mxu0 0.0
    %80 = vmatpush1.msra.mxu0 0.0
    %81 = vmatprep.subr.mxu0 0.0
    %82 = vmatpush1.msra.mxu0 0.0
    %83 = vmatprep.subr.mxu0 0.0
    %84 = vmatpush1.msra.mxu0 0.0
    %85 = vmatprep.subr.mxu0 0.0
    %86 = vmatpush1.msra.mxu0 0.0
    %87 = vmatprep.subr.mxu0 0.0
    %88 = vmatpush1.msra.mxu0 0.0
    %89 = vmatprep.subr.mxu0 0.0
    %90 = vmatpush1.msra.mxu0 0.0
    %91 = vmatprep.subr.mxu0 0.0
    %92 = vmatpush1.msra.mxu0 0.0
    %93 = vmatprep.subr.mxu0 0.0
    %94 = vmatpush1.msra.mxu0 0.0
    %95 = vmatprep.subr.mxu0 0.0
    %96 = vmatpush1.msra.mxu0 0.0
    %97 = vmatprep.subr.mxu0 0.0
    %98 = vmatpush1.msra.mxu0 0.0
    %99 = vmatprep.subr.mxu0 0.0
    %100 = vmatpush1.msra.mxu0 0.0
    %101 = vmatprep.subr.mxu0 0.0
    %102 = vmatpush1.msra.mxu0 0.0
    %103 = vmatprep.subr.mxu0 0.0
    %104 = vmatpush1.msra.mxu0 0.0
    %105 = vmatprep.subr.mxu0 0.0
    %106 = vmatpush1.msra.mxu0 0.0
    %107 = vmatprep.subr.mxu0 0.0
    %108 = vmatpush1.msra.mxu0 0.0
    %109 = vmatprep.subr.mxu0 0.0
    %110 = vmatpush1.msra.mxu0 0.0
    %111 = vmatprep.subr.mxu0 0.0
    %112 = vmatpush1.msra.mxu0 0.0
    %113 = vmatprep.subr.mxu0 0.0
    %114 = vmatpush1.msra.mxu0 0.0
    %115 = vmatprep.subr.mxu0 0.0
    %116 = vmatpush1.msra.mxu0 0.0
    %117 = vmatprep.subr.mxu0 0.0
    %118 = vmatpush1.msra.mxu0 0.0
    %119 = vmatprep.subr.mxu0 0.0
    %120 = vmatpush1.msra.mxu0 0.0
    %121 = vmatprep.subr.mxu0 0.0
    %122 = vmatpush1.msra.mxu0 0.0
    %123 = vmatprep.subr.mxu0 0.0
    %124 = vmatpush1.msra.mxu0 0.0
    %125 = vmatprep.subr.mxu0 0.0
    %126 = vmatpush1.msra.mxu0 0.0
    %127 = vmatprep.mubr.f32.mxu0 0.0
    %128 = vmatmul.mubr.f32.gmra.mrb[0].mxu0 %v54
    %v129 = vpop.f32.mrb[0].mxu0
    %v130 = vadd.f32 0.0, %v129
    %v131 = vpop.f32.mrb[0].mxu0
    %132 = vmatprep.mubr.f32.mxu0 0.0
    %133 = vmatmul.mubr.f32.gmra.mrb[0].mxu0 %v57
    %v134 = vpop.f32.mrb[0].mxu0
    %v135 = vadd.f32 0.0, %v134
    %v136 = vpop.f32.mrb[0].mxu0
    %137 = vdwg.mxu0
    %v138 = vld [vmem:[%s2] sm:$0xff]
    %v139 = vld [vmem:[%s2 + $0x8] sm:$0xff]
    %v140 = vld [vmem:[%s2 + $0x10] sm:$0xff]
    %v141 = vld [vmem:[%s2 + $0x18] sm:$0xff]
    %vm142 = vcmask 261120
    %v144 = vsel %vm142, 0.0, 0
    %146 = vmatprep.subr.mxu0 0.0
    %147 = vmatpush1.msra.mxu0 %v138
    %148 = vmatprep.subr.mxu0 0.0
    %149 = vmatpush1.msra.mxu0 %v139
    %150 = vmatprep.subr.mxu0 0.0
    %151 = vmatpush1.msra.mxu0 %v140
    %152 = vmatprep.subr.mxu0 0.0
    %153 = vmatpush1.msra.mxu0 %v141
    %154 = vmatprep.subr.mxu0 0.0
    %155 = vmatpush1.msra.mxu0 0.0
    %156 = vmatprep.subr.mxu0 0.0
    %157 = vmatpush1.msra.mxu0 0.0
    %158 = vmatprep.subr.mxu0 0.0
    %159 = vmatpush1.msra.mxu0 0.0
    %160 = vmatprep.subr.mxu0 0.0
    %161 = vmatpush1.msra.mxu0 0.0
    %162 = vmatprep.subr.mxu0 0.0
    %163 = vmatpush1.msra.mxu0 0.0
    %164 = vmatprep.subr.mxu0 0.0
    %165 = vmatpush1.msra.mxu0 0.0
    %166 = vmatprep.subr.mxu0 0.0
    %167 = vmatpush1.msra.mxu0 0.0
    %168 = vmatprep.subr.mxu0 0.0
    %169 = vmatpush1.msra.mxu0 0.0
    %170 = vmatprep.subr.mxu0 0.0
    %171 = vmatpush1.msra.mxu0 0.0
    %172 = vmatprep.subr.mxu0 0.0
    %173 = vmatpush1.msra.mxu0 0.0
    %174 = vmatprep.subr.mxu0 0.0
    %175 = vmatpush1.msra.mxu0 0.0
    %176 = vmatprep.subr.mxu0 0.0
    %177 = vmatpush1.msra.mxu0 0.0
    %178 = vmatprep.subr.mxu0 0.0
    %179 = vmatpush1.msra.mxu0 0.0
    %180 = vmatprep.subr.mxu0 0.0
    %181 = vmatpush1.msra.mxu0 0.0
    %182 = vmatprep.subr.mxu0 0.0
    %183 = vmatpush1.msra.mxu0 0.0
    %184 = vmatprep.subr.mxu0 0.0
    %185 = vmatpush1.msra.mxu0 0.0
    %186 = vmatprep.subr.mxu0 0.0
    %187 = vmatpush1.msra.mxu0 0.0
    %188 = vmatprep.subr.mxu0 0.0
    %189 = vmatpush1.msra.mxu0 0.0
    %190 = vmatprep.subr.mxu0 0.0
    %191 = vmatpush1.msra.mxu0 0.0
    %192 = vmatprep.subr.mxu0 0.0
    %193 = vmatpush1.msra.mxu0 0.0
    %194 = vmatprep.subr.mxu0 0.0
    %195 = vmatpush1.msra.mxu0 0.0
    %196 = vmatprep.subr.mxu0 0.0
    %197 = vmatpush1.msra.mxu0 0.0
    %198 = vmatprep.subr.mxu0 0.0
    %199 = vmatpush1.msra.mxu0 0.0
    %200 = vmatprep.subr.mxu0 0.0
    %201 = vmatpush1.msra.mxu0 0.0
    %202 = vmatprep.subr.mxu0 0.0
    %203 = vmatpush1.msra.mxu0 0.0
    %204 = vmatprep.subr.mxu0 0.0
    %205 = vmatpush1.msra.mxu0 0.0
    %206 = vmatprep.subr.mxu0 0.0
    %207 = vmatpush1.msra.mxu0 0.0
    %208 = vmatprep.subr.mxu0 0.0
    %209 = vmatpush1.msra.mxu0 0.0
    %210 = vmatprep.mubr.f32.mxu0 0.0
    %211 = vmatmul.mubr.f32.gmra.mrb[0].mxu0 %v144
    %v212 = vpop.f32.mrb[0].mxu0
    %v213 = vadd.f32 0.0, %v212
    %v214 = vpop.f32.mrb[0].mxu0
    %215 = vdwg.mxu0
    %v216 = vadd.f32 %v130, %v213
    %v217 = vtanh.pop %v216
    %vm218 = vcmask 254976
    %219 = vst.msk [vmem:[#allocation2] sm:$0x3] %vm218, %v217
    %v221 = vsel %vm142, %v217, 0
    %223 = vmatprep.subr.mxu0 0.0
    %224 = vmatpush1.msra.mxu0 %v138
    %225 = vmatprep.subr.mxu0 0.0
    %226 = vmatpush1.msra.mxu0 %v139
    %227 = vmatprep.subr.mxu0 0.0
    %228 = vmatpush1.msra.mxu0 %v140
    %229 = vmatprep.subr.mxu0 0.0
    %230 = vmatpush1.msra.mxu0 %v141
    %231 = vmatprep.subr.mxu0 0.0
    %232 = vmatpush1.msra.mxu0 0.0
    %233 = vmatprep.subr.mxu0 0.0
    %234 = vmatpush1.msra.mxu0 0.0
    %235 = vmatprep.subr.mxu0 0.0
    %236 = vmatpush1.msra.mxu0 0.0
    %237 = vmatprep.subr.mxu0 0.0
    %238 = vmatpush1.msra.mxu0 0.0
    %239 = vmatprep.subr.mxu0 0.0
    %240 = vmatpush1.msra.mxu0 0.0
    %241 = vmatprep.subr.mxu0 0.0
    %242 = vmatpush1.msra.mxu0 0.0
    %243 = vmatprep.subr.mxu0 0.0
    %244 = vmatpush1.msra.mxu0 0.0
    %245 = vmatprep.subr.mxu0 0.0
    %246 = vmatpush1.msra.mxu0 0.0
    %247 = vmatprep.subr.mxu0 0.0
    %248 = vmatpush1.msra.mxu0 0.0
    %249 = vmatprep.subr.mxu0 0.0
    %250 = vmatpush1.msra.mxu0 0.0
    %251 = vmatprep.subr.mxu0 0.0
    %252 = vmatpush1.msra.mxu0 0.0
    %253 = vmatprep.subr.mxu0 0.0
    %254 = vmatpush1.msra.mxu0 0.0
    %255 = vmatprep.subr.mxu0 0.0
    %256 = vmatpush1.msra.mxu0 0.0
    %257 = vmatprep.subr.mxu0 0.0
    %258 = vmatpush1.msra.mxu0 0.0
    %259 = vmatprep.subr.mxu0 0.0
    %260 = vmatpush1.msra.mxu0 0.0
    %261 = vmatprep.subr.mxu0 0.0
    %262 = vmatpush1.msra.mxu0 0.0
    %263 = vmatprep.subr.mxu0 0.0
    %264 = vmatpush1.msra.mxu0 0.0
    %265 = vmatprep.subr.mxu0 0.0
    %266 = vmatpush1.msra.mxu0 0.0
    %267 = vmatprep.subr.mxu0 0.0
    %268 = vmatpush1.msra.mxu0 0.0
    %269 = vmatprep.subr.mxu0 0.0
    %270 = vmatpush1.msra.mxu0 0.0
    %271 = vmatprep.subr.mxu0 0.0
    %272 = vmatpush1.msra.mxu0 0.0
    %273 = vmatprep.subr.mxu0 0.0
    %274 = vmatpush1.msra.mxu0 0.0
    %275 = vmatprep.subr.mxu0 0.0
    %276 = vmatpush1.msra.mxu0 0.0
    %277 = vmatprep.subr.mxu0 0.0
    %278 = vmatpush1.msra.mxu0 0.0
    %279 = vmatprep.subr.mxu0 0.0
    %280 = vmatpush1.msra.mxu0 0.0
    %281 = vmatprep.subr.mxu0 0.0
    %282 = vmatpush1.msra.mxu0 0.0
    %283 = vmatprep.subr.mxu0 0.0
    %284 = vmatpush1.msra.mxu0 0.0
    %285 = vmatprep.subr.mxu0 0.0
    %286 = vmatpush1.msra.mxu0 0.0
    %287 = vmatprep.mubr.f32.mxu0 0.0
    %288 = vmatmul.mubr.f32.gmra.mrb[0].mxu0 %v221
    %v289 = vpop.f32.mrb[0].mxu0
    %v290 = vadd.f32 0.0, %v289
    %v291 = vpop.f32.mrb[0].mxu0
    %292 = vdwg.mxu0
    %v294 = vrot.slane %v290, 6
    %v296 = vadd.f32 %v130, %v294
    %v297 = vtanh.pop %v296
    %vm298 = vcmask 257026
    %299 = vst.msk [vmem:[#allocation2] sm:$0xc] %vm298, %v297
    %v301 = vrot.slane %v297, 2
    %v302 = vsel %vm142, %v301, 0
    %304 = vmatprep.subr.mxu0 0.0
    %305 = vmatpush1.msra.mxu0 %v138
    %306 = vmatprep.subr.mxu0 0.0
    %307 = vmatpush1.msra.mxu0 %v139
    %308 = vmatprep.subr.mxu0 0.0
    %309 = vmatpush1.msra.mxu0 %v140
    %310 = vmatprep.subr.mxu0 0.0
    %311 = vmatpush1.msra.mxu0 %v141
    %312 = vmatprep.subr.mxu0 0.0
    %313 = vmatpush1.msra.mxu0 0.0
    %314 = vmatprep.subr.mxu0 0.0
    %315 = vmatpush1.msra.mxu0 0.0
    %316 = vmatprep.subr.mxu0 0.0
    %317 = vmatpush1.msra.mxu0 0.0
    %318 = vmatprep.subr.mxu0 0.0
    %319 = vmatpush1.msra.mxu0 0.0
    %320 = vmatprep.subr.mxu0 0.0
    %321 = vmatpush1.msra.mxu0 0.0
    %322 = vmatprep.subr.mxu0 0.0
    %323 = vmatpush1.msra.mxu0 0.0
    %324 = vmatprep.subr.mxu0 0.0
    %325 = vmatpush1.msra.mxu0 0.0
    %326 = vmatprep.subr.mxu0 0.0
    %327 = vmatpush1.msra.mxu0 0.0
    %328 = vmatprep.subr.mxu0 0.0
    %329 = vmatpush1.msra.mxu0 0.0
    %330 = vmatprep.subr.mxu0 0.0
    %331 = vmatpush1.msra.mxu0 0.0
    %332 = vmatprep.subr.mxu0 0.0
    %333 = vmatpush1.msra.mxu0 0.0
    %334 = vmatprep.subr.mxu0 0.0
    %335 = vmatpush1.msra.mxu0 0.0
    %336 = vmatprep.subr.mxu0 0.0
    %337 = vmatpush1.msra.mxu0 0.0
    %338 = vmatprep.subr.mxu0 0.0
    %339 = vmatpush1.msra.mxu0 0.0
    %340 = vmatprep.subr.mxu0 0.0
    %341 = vmatpush1.msra.mxu0 0.0
    %342 = vmatprep.subr.mxu0 0.0
    %343 = vmatpush1.msra.mxu0 0.0
    %344 = vmatprep.subr.mxu0 0.0
    %345 = vmatpush1.msra.mxu0 0.0
    %346 = vmatprep.subr.mxu0 0.0
    %347 = vmatpush1.msra.mxu0 0.0
    %348 = vmatprep.subr.mxu0 0.0
    %349 = vmatpush1.msra.mxu0 0.0
    %350 = vmatprep.subr.mxu0 0.0
    %351 = vmatpush1.msra.mxu0 0.0
    %352 = vmatprep.subr.mxu0 0.0
    %353 = vmatpush1.msra.mxu0 0.0
    %354 = vmatprep.subr.mxu0 0.0
    %355 = vmatpush1.msra.mxu0 0.0
    %356 = vmatprep.subr.mxu0 0.0
    %357 = vmatpush1.msra.mxu0 0.0
    %358 = vmatprep.subr.mxu0 0.0
    %359 = vmatpush1.msra.mxu0 0.0
    %360 = vmatprep.subr.mxu0 0.0
    %361 = vmatpush1.msra.mxu0 0.0
    %362 = vmatprep.subr.mxu0 0.0
    %363 = vmatpush1.msra.mxu0 0.0
    %364 = vmatprep.subr.mxu0 0.0
    %365 = vmatpush1.msra.mxu0 0.0
    %366 = vmatprep.subr.mxu0 0.0
    %367 = vmatpush1.msra.mxu0 0.0
    %368 = vmatprep.mubr.f32.mxu0 0.0
    %369 = vmatmul.mubr.f32.gmra.mrb[0].mxu0 %v302
    %v370 = vpop.f32.mrb[0].mxu0
    %v371 = vadd.f32 0.0, %v370
    %v372 = vpop.f32.mrb[0].mxu0
    %373 = vdwg.mxu0
    %v375 = vrot.slane %v371, 4
    %v377 = vadd.f32 %v130, %v375
    %v378 = vtanh.pop %v377
    %vm379 = vcmask 259076
    %380 = vst.msk [vmem:[#allocation2] sm:$0x30] %vm379, %v378
    %v382 = vrot.slane %v378, 4
    %v383 = vsel %vm142, %v382, 0
    %385 = vmatprep.subr.mxu0 0.0
    %386 = vmatpush1.msra.mxu0 %v138
    %387 = vmatprep.subr.mxu0 0.0
    %388 = vmatpush1.msra.mxu0 %v139
    %389 = vmatprep.subr.mxu0 0.0
    %390 = vmatpush1.msra.mxu0 %v140
    %391 = vmatprep.subr.mxu0 0.0
    %392 = vmatpush1.msra.mxu0 %v141
    %393 = vmatprep.subr.mxu0 0.0
    %394 = vmatpush1.msra.mxu0 0.0
    %395 = vmatprep.subr.mxu0 0.0
    %396 = vmatpush1.msra.mxu0 0.0
    %397 = vmatprep.subr.mxu0 0.0
    %398 = vmatpush1.msra.mxu0 0.0
    %399 = vmatprep.subr.mxu0 0.0
    %400 = vmatpush1.msra.mxu0 0.0
    %401 = vmatprep.subr.mxu0 0.0
    %402 = vmatpush1.msra.mxu0 0.0
    %403 = vmatprep.subr.mxu0 0.0
    %404 = vmatpush1.msra.mxu0 0.0
    %405 = vmatprep.subr.mxu0 0.0
    %406 = vmatpush1.msra.mxu0 0.0
    %407 = vmatprep.subr.mxu0 0.0
    %408 = vmatpush1.msra.mxu0 0.0
    %409 = vmatprep.subr.mxu0 0.0
    %410 = vmatpush1.msra.mxu0 0.0
    %411 = vmatprep.subr.mxu0 0.0
    %412 = vmatpush1.msra.mxu0 0.0
    %413 = vmatprep.subr.mxu0 0.0
    %414 = vmatpush1.msra.mxu0 0.0
    %415 = vmatprep.subr.mxu0 0.0
    %416 = vmatpush1.msra.mxu0 0.0
    %417 = vmatprep.subr.mxu0 0.0
    %418 = vmatpush1.msra.mxu0 0.0
    %419 = vmatprep.subr.mxu0 0.0
    %420 = vmatpush1.msra.mxu0 0.0
    %421 = vmatprep.subr.mxu0 0.0
    %422 = vmatpush1.msra.mxu0 0.0
    %423 = vmatprep.subr.mxu0 0.0
    %424 = vmatpush1.msra.mxu0 0.0
    %425 = vmatprep.subr.mxu0 0.0
    %426 = vmatpush1.msra.mxu0 0.0
    %427 = vmatprep.subr.mxu0 0.0
    %428 = vmatpush1.msra.mxu0 0.0
    %429 = vmatprep.subr.mxu0 0.0
    %430 = vmatpush1.msra.mxu0 0.0
    %431 = vmatprep.subr.mxu0 0.0
    %432 = vmatpush1.msra.mxu0 0.0
    %433 = vmatprep.subr.mxu0 0.0
    %434 = vmatpush1.msra.mxu0 0.0
    %435 = vmatprep.subr.mxu0 0.0
    %436 = vmatpush1.msra.mxu0 0.0
    %437 = vmatprep.subr.mxu0 0.0
    %438 = vmatpush1.msra.mxu0 0.0
    %439 = vmatprep.subr.mxu0 0.0
    %440 = vmatpush1.msra.mxu0 0.0
    %441 = vmatprep.subr.mxu0 0.0
    %442 = vmatpush1.msra.mxu0 0.0
    %443 = vmatprep.subr.mxu0 0.0
    %444 = vmatpush1.msra.mxu0 0.0
    %445 = vmatprep.subr.mxu0 0.0
    %446 = vmatpush1.msra.mxu0 0.0
    %447 = vmatprep.subr.mxu0 0.0
    %448 = vmatpush1.msra.mxu0 0.0
    %449 = vmatprep.mubr.f32.mxu0 0.0
    %450 = vmatmul.mubr.f32.gmra.mrb[0].mxu0 %v383
    %v451 = vpop.f32.mrb[0].mxu0
    %v452 = vadd.f32 0.0, %v451
    %v453 = vpop.f32.mrb[0].mxu0
    %454 = vdwg.mxu0
    %v456 = vrot.slane %v452, 2
    %v458 = vadd.f32 %v130, %v456
    %v459 = vtanh.pop %v458
    %vm460 = vcmask 261126
    %461 = vst.msk [vmem:[#allocation2] sm:$0xc0] %vm460, %v459
    %v463 = vrot.slane %v459, 6
    %v464 = vsel %vm142, %v463, 0
    %466 = vmatprep.subr.mxu0 0.0
    %467 = vmatpush1.msra.mxu0 %v138
    %468 = vmatprep.subr.mxu0 0.0
    %469 = vmatpush1.msra.mxu0 %v139
    %470 = vmatprep.subr.mxu0 0.0
    %471 = vmatpush1.msra.mxu0 %v140
    %472 = vmatprep.subr.mxu0 0.0
    %473 = vmatpush1.msra.mxu0 %v141
    %474 = vmatprep.subr.mxu0 0.0
    %475 = vmatpush1.msra.mxu0 0.0
    %476 = vmatprep.subr.mxu0 0.0
    %477 = vmatpush1.msra.mxu0 0.0
    %478 = vmatprep.subr.mxu0 0.0
    %479 = vmatpush1.msra.mxu0 0.0
    %480 = vmatprep.subr.mxu0 0.0
    %481 = vmatpush1.msra.mxu0 0.0
    %482 = vmatprep.subr.mxu0 0.0
    %483 = vmatpush1.msra.mxu0 0.0
    %484 = vmatprep.subr.mxu0 0.0
    %485 = vmatpush1.msra.mxu0 0.0
    %486 = vmatprep.subr.mxu0 0.0
    %487 = vmatpush1.msra.mxu0 0.0
    %488 = vmatprep.subr.mxu0 0.0
    %489 = vmatpush1.msra.mxu0 0.0
    %490 = vmatprep.subr.mxu0 0.0
    %491 = vmatpush1.msra.mxu0 0.0
    %492 = vmatprep.subr.mxu0 0.0
    %493 = vmatpush1.msra.mxu0 0.0
    %494 = vmatprep.subr.mxu0 0.0
    %495 = vmatpush1.msra.mxu0 0.0
    %496 = vmatprep.subr.mxu0 0.0
    %497 = vmatpush1.msra.mxu0 0.0
    %498 = vmatprep.subr.mxu0 0.0
    %499 = vmatpush1.msra.mxu0 0.0
    %500 = vmatprep.subr.mxu0 0.0
    %501 = vmatpush1.msra.mxu0 0.0
    %502 = vmatprep.subr.mxu0 0.0
    %503 = vmatpush1.msra.mxu0 0.0
    %504 = vmatprep.subr.mxu0 0.0
    %505 = vmatpush1.msra.mxu0 0.0
    %506 = vmatprep.subr.mxu0 0.0
    %507 = vmatpush1.msra.mxu0 0.0
    %508 = vmatprep.subr.mxu0 0.0
    %509 = vmatpush1.msra.mxu0 0.0
    %510 = vmatprep.subr.mxu0 0.0
    %511 = vmatpush1.msra.mxu0 0.0
    %512 = vmatprep.subr.mxu0 0.0
    %513 = vmatpush1.msra.mxu0 0.0
    %514 = vmatprep.subr.mxu0 0.0
    %515 = vmatpush1.msra.mxu0 0.0
    %516 = vmatprep.subr.mxu0 0.0
    %517 = vmatpush1.msra.mxu0 0.0
    %518 = vmatprep.subr.mxu0 0.0
    %519 = vmatpush1.msra.mxu0 0.0
    %520 = vmatprep.subr.mxu0 0.0
    %521 = vmatpush1.msra.mxu0 0.0
    %522 = vmatprep.subr.mxu0 0.0
    %523 = vmatpush1.msra.mxu0 0.0
    %524 = vmatprep.subr.mxu0 0.0
    %525 = vmatpush1.msra.mxu0 0.0
    %526 = vmatprep.subr.mxu0 0.0
    %527 = vmatpush1.msra.mxu0 0.0
    %528 = vmatprep.subr.mxu0 0.0
    %529 = vmatpush1.msra.mxu0 0.0
    %530 = vmatprep.mubr.f32.mxu0 0.0
    %531 = vmatmul.mubr.f32.gmra.mrb[0].mxu0 %v464
    %v532 = vpop.f32.mrb[0].mxu0
    %v533 = vadd.f32 0.0, %v532
    %v534 = vpop.f32.mrb[0].mxu0
    %535 = vdwg.mxu0
    %v536 = vadd.f32 %v135, %v533
    %v537 = vtanh.pop %v536
    %538 = vst.msk [vmem:[#allocation2 + $0x8] sm:$0x3] %vm218, %v537
    %v540 = vsel %vm142, %v537, 0
    %542 = vmatprep.subr.mxu0 0.0
    %543 = vmatpush1.msra.mxu0 %v138
    %544 = vmatprep.subr.mxu0 0.0
    %545 = vmatpush1.msra.mxu0 %v139
    %546 = vmatprep.subr.mxu0 0.0
    %547 = vmatpush1.msra.mxu0 %v140
    %548 = vmatprep.subr.mxu0 0.0
    %549 = vmatpush1.msra.mxu0 %v141
    %550 = vmatprep.subr.mxu0 0.0
    %551 = vmatpush1.msra.mxu0 0.0
    %552 = vmatprep.subr.mxu0 0.0
    %553 = vmatpush1.msra.mxu0 0.0
    %554 = vmatprep.subr.mxu0 0.0
    %555 = vmatpush1.msra.mxu0 0.0
    %556 = vmatprep.subr.mxu0 0.0
    %557 = vmatpush1.msra.mxu0 0.0
    %558 = vmatprep.subr.mxu0 0.0
    %559 = vmatpush1.msra.mxu0 0.0
    %560 = vmatprep.subr.mxu0 0.0
    %561 = vmatpush1.msra.mxu0 0.0
    %562 = vmatprep.subr.mxu0 0.0
    %563 = vmatpush1.msra.mxu0 0.0
    %564 = vmatprep.subr.mxu0 0.0
    %565 = vmatpush1.msra.mxu0 0.0
    %566 = vmatprep.subr.mxu0 0.0
    %567 = vmatpush1.msra.mxu0 0.0
    %568 = vmatprep.subr.mxu0 0.0
    %569 = vmatpush1.msra.mxu0 0.0
    %570 = vmatprep.subr.mxu0 0.0
    %571 = vmatpush1.msra.mxu0 0.0
    %572 = vmatprep.subr.mxu0 0.0
    %573 = vmatpush1.msra.mxu0 0.0
    %574 = vmatprep.subr.mxu0 0.0
    %575 = vmatpush1.msra.mxu0 0.0
    %576 = vmatprep.subr.mxu0 0.0
    %577 = vmatpush1.msra.mxu0 0.0
    %578 = vmatprep.subr.mxu0 0.0
    %579 = vmatpush1.msra.mxu0 0.0
    %580 = vmatprep.subr.mxu0 0.0
    %581 = vmatpush1.msra.mxu0 0.0
    %582 = vmatprep.subr.mxu0 0.0
    %583 = vmatpush1.msra.mxu0 0.0
    %584 = vmatprep.subr.mxu0 0.0
    %585 = vmatpush1.msra.mxu0 0.0
    %586 = vmatprep.subr.mxu0 0.0
    %587 = vmatpush1.msra.mxu0 0.0
    %588 = vmatprep.subr.mxu0 0.0
    %589 = vmatpush1.msra.mxu0 0.0
    %590 = vmatprep.subr.mxu0 0.0
    %591 = vmatpush1.msra.mxu0 0.0
    %592 = vmatprep.subr.mxu0 0.0
    %593 = vmatpush1.msra.mxu0 0.0
    %594 = vmatprep.subr.mxu0 0.0
    %595 = vmatpush1.msra.mxu0 0.0
    %596 = vmatprep.subr.mxu0 0.0
    %597 = vmatpush1.msra.mxu0 0.0
    %598 = vmatprep.subr.mxu0 0.0
    %599 = vmatpush1.msra.mxu0 0.0
    %600 = vmatprep.subr.mxu0 0.0
    %601 = vmatpush1.msra.mxu0 0.0
    %602 = vmatprep.subr.mxu0 0.0
    %603 = vmatpush1.msra.mxu0 0.0
    %604 = vmatprep.subr.mxu0 0.0
    %605 = vmatpush1.msra.mxu0 0.0
    %606 = vmatprep.mubr.f32.mxu0 0.0
    %607 = vmatmul.mubr.f32.gmra.mrb[0].mxu0 %v540
    %v608 = vpop.f32.mrb[0].mxu0
    %v609 = vadd.f32 0.0, %v608
    %v610 = vpop.f32.mrb[0].mxu0
    %611 = vdwg.mxu0
    %v613 = vrot.slane %v609, 6
    %v615 = vadd.f32 %v135, %v613
    %v616 = vtanh.pop %v615
    %617 = vst.msk [vmem:[#allocation2 + $0x8] sm:$0xc] %vm298, %v616
    %v619 = vrot.slane %v616, 2
    %v620 = vsel %vm142, %v619, 0
    %622 = vmatprep.subr.mxu0 0.0
    %623 = vmatpush1.msra.mxu0 %v138
    %624 = vmatprep.subr.mxu0 0.0
    %625 = vmatpush1.msra.mxu0 %v139
    %626 = vmatprep.subr.mxu0 0.0
    %627 = vmatpush1.msra.mxu0 %v140
    %628 = vmatprep.subr.mxu0 0.0
    %629 = vmatpush1.msra.mxu0 %v141
    %630 = vmatprep.subr.mxu0 0.0
    %631 = vmatpush1.msra.mxu0 0.0
    %632 = vmatprep.subr.mxu0 0.0
    %633 = vmatpush1.msra.mxu0 0.0
    %634 = vmatprep.subr.mxu0 0.0
    %635 = vmatpush1.msra.mxu0 0.0
    %636 = vmatprep.subr.mxu0 0.0
    %637 = vmatpush1.msra.mxu0 0.0
    %638 = vmatprep.subr.mxu0 0.0
    %639 = vmatpush1.msra.mxu0 0.0
    %640 = vmatprep.subr.mxu0 0.0
    %641 = vmatpush1.msra.mxu0 0.0
    %642 = vmatprep.subr.mxu0 0.0
    %643 = vmatpush1.msra.mxu0 0.0
    %644 = vmatprep.subr.mxu0 0.0
    %645 = vmatpush1.msra.mxu0 0.0
    %646 = vmatprep.subr.mxu0 0.0
    %647 = vmatpush1.msra.mxu0 0.0
    %648 = vmatprep.subr.mxu0 0.0
    %649 = vmatpush1.msra.mxu0 0.0
    %650 = vmatprep.subr.mxu0 0.0
    %651 = vmatpush1.msra.mxu0 0.0
    %652 = vmatprep.subr.mxu0 0.0
    %653 = vmatpush1.msra.mxu0 0.0
    %654 = vmatprep.subr.mxu0 0.0
    %655 = vmatpush1.msra.mxu0 0.0
    %656 = vmatprep.subr.mxu0 0.0
    %657 = vmatpush1.msra.mxu0 0.0
    %658 = vmatprep.subr.mxu0 0.0
    %659 = vmatpush1.msra.mxu0 0.0
    %660 = vmatprep.subr.mxu0 0.0
    %661 = vmatpush1.msra.mxu0 0.0
    %662 = vmatprep.subr.mxu0 0.0
    %663 = vmatpush1.msra.mxu0 0.0
    %664 = vmatprep.subr.mxu0 0.0
    %665 = vmatpush1.msra.mxu0 0.0
    %666 = vmatprep.subr.mxu0 0.0
    %667 = vmatpush1.msra.mxu0 0.0
    %668 = vmatprep.subr.mxu0 0.0
    %669 = vmatpush1.msra.mxu0 0.0
    %670 = vmatprep.subr.mxu0 0.0
    %671 = vmatpush1.msra.mxu0 0.0
    %672 = vmatprep.subr.mxu0 0.0
    %673 = vmatpush1.msra.mxu0 0.0
    %674 = vmatprep.subr.mxu0 0.0
    %675 = vmatpush1.msra.mxu0 0.0
    %676 = vmatprep.subr.mxu0 0.0
    %677 = vmatpush1.msra.mxu0 0.0
    %678 = vmatprep.subr.mxu0 0.0
    %679 = vmatpush1.msra.mxu0 0.0
    %680 = vmatprep.subr.mxu0 0.0
    %681 = vmatpush1.msra.mxu0 0.0
    %682 = vmatprep.subr.mxu0 0.0
    %683 = vmatpush1.msra.mxu0 0.0
    %684 = vmatprep.subr.mxu0 0.0
    %685 = vmatpush1.msra.mxu0 0.0
    %686 = vmatprep.mubr.f32.mxu0 0.0
    %687 = vmatmul.mubr.f32.gmra.mrb[0].mxu0 %v620
    %v688 = vpop.f32.mrb[0].mxu0
    %v689 = vadd.f32 0.0, %v688
    %v690 = vpop.f32.mrb[0].mxu0
    %691 = vdwg.mxu0
    %v693 = vrot.slane %v689, 4
    %v695 = vadd.f32 %v135, %v693
    %v696 = vtanh.pop %v695
    %697 = vst.msk [vmem:[#allocation2 + $0x8] sm:$0x30] %vm379, %v696
    %v699 = vrot.slane %v696, 4
    %v700 = vsel %vm142, %v699, 0
    %702 = vmatprep.subr.mxu0 0.0
    %703 = vmatpush1.msra.mxu0 %v138
    %704 = vmatprep.subr.mxu0 0.0
    %705 = vmatpush1.msra.mxu0 %v139
    %706 = vmatprep.subr.mxu0 0.0
    %707 = vmatpush1.msra.mxu0 %v140
    %708 = vmatprep.subr.mxu0 0.0
    %709 = vmatpush1.msra.mxu0 %v141
    %710 = vmatprep.subr.mxu0 0.0
    %711 = vmatpush1.msra.mxu0 0.0
    %712 = vmatprep.subr.mxu0 0.0
    %713 = vmatpush1.msra.mxu0 0.0
    %714 = vmatprep.subr.mxu0 0.0
    %715 = vmatpush1.msra.mxu0 0.0
    %716 = vmatprep.subr.mxu0 0.0
    %717 = vmatpush1.msra.mxu0 0.0
    %718 = vmatprep.subr.mxu0 0.0
    %719 = vmatpush1.msra.mxu0 0.0
    %720 = vmatprep.subr.mxu0 0.0
    %721 = vmatpush1.msra.mxu0 0.0
    %722 = vmatprep.subr.mxu0 0.0
    %723 = vmatpush1.msra.mxu0 0.0
    %724 = vmatprep.subr.mxu0 0.0
    %725 = vmatpush1.msra.mxu0 0.0
    %726 = vmatprep.subr.mxu0 0.0
    %727 = vmatpush1.msra.mxu0 0.0
    %728 = vmatprep.subr.mxu0 0.0
    %729 = vmatpush1.msra.mxu0 0.0
    %730 = vmatprep.subr.mxu0 0.0
    %731 = vmatpush1.msra.mxu0 0.0
    %732 = vmatprep.subr.mxu0 0.0
    %733 = vmatpush1.msra.mxu0 0.0
    %734 = vmatprep.subr.mxu0 0.0
    %735 = vmatpush1.msra.mxu0 0.0
    %736 = vmatprep.subr.mxu0 0.0
    %737 = vmatpush1.msra.mxu0 0.0
    %738 = vmatprep.subr.mxu0 0.0
    %739 = vmatpush1.msra.mxu0 0.0
    %740 = vmatprep.subr.mxu0 0.0
    %741 = vmatpush1.msra.mxu0 0.0
    %742 = vmatprep.subr.mxu0 0.0
    %743 = vmatpush1.msra.mxu0 0.0
    %744 = vmatprep.subr.mxu0 0.0
    %745 = vmatpush1.msra.mxu0 0.0
    %746 = vmatprep.subr.mxu0 0.0
    %747 = vmatpush1.msra.mxu0 0.0
    %748 = vmatprep.subr.mxu0 0.0
    %749 = vmatpush1.msra.mxu0 0.0
    %750 = vmatprep.subr.mxu0 0.0
    %751 = vmatpush1.msra.mxu0 0.0
    %752 = vmatprep.subr.mxu0 0.0
    %753 = vmatpush1.msra.mxu0 0.0
    %754 = vmatprep.subr.mxu0 0.0
    %755 = vmatpush1.msra.mxu0 0.0
    %756 = vmatprep.subr.mxu0 0.0
    %757 = vmatpush1.msra.mxu0 0.0
    %758 = vmatprep.subr.mxu0 0.0
    %759 = vmatpush1.msra.mxu0 0.0
    %760 = vmatprep.subr.mxu0 0.0
    %761 = vmatpush1.msra.mxu0 0.0
    %762 = vmatprep.subr.mxu0 0.0
    %763 = vmatpush1.msra.mxu0 0.0
    %764 = vmatprep.subr.mxu0 0.0
    %765 = vmatpush1.msra.mxu0 0.0
    %766 = vmatprep.mubr.f32.mxu0 0.0
    %767 = vmatmul.mubr.f32.gmra.mrb[0].mxu0 %v700
    %v768 = vpop.f32.mrb[0].mxu0
    %v769 = vadd.f32 0.0, %v768
    %v770 = vpop.f32.mrb[0].mxu0
    %771 = vdwg.mxu0
    %v773 = vrot.slane %v769, 2
    %v775 = vadd.f32 %v135, %v773
    %v776 = vtanh.pop %v775
    %777 = vst.msk [vmem:[#allocation2 + $0x8] sm:$0xc0] %vm460, %v776
    %v778 = vld [vmem:[#allocation2] sm:$0xff]
    %v779 = vld [vmem:[#allocation2 + $0x8] sm:$0xff]
    %v780 = vld [vmem:[%s3] sm:$0xff]
    %v781 = vld [vmem:[%s3 + $0x8] sm:$0xff]
    %v782 = vld [vmem:[%s3 + $0x10] sm:$0xff]
    %v783 = vld [vmem:[%s3 + $0x18] sm:$0xff]
    %v784 = vld [vmem:[%s4] sm:$0x1]
    %v786 = vlaneseq
    %v787 = vshrl.u32 %v786, 7
    %v788 = vsub.s32 0, %v787
    %v789 = vrot.slane %v784, %v788
    %v792 = vsel %vm142, %v778, 0
    %v795 = vsel %vm142, %v779, 0
    %797 = vmatprep.subr.mxu0 0.0
    %798 = vmatpush1.msra.mxu0 %v780
    %799 = vmatprep.subr.mxu0 0.0
    %800 = vmatpush1.msra.mxu0 %v781
    %801 = vmatprep.subr.mxu0 0.0
    %802 = vmatpush1.msra.mxu0 %v782
    %803 = vmatprep.subr.mxu0 0.0
    %804 = vmatpush1.msra.mxu0 %v783
    %805 = vmatprep.subr.mxu0 0.0
    %806 = vmatpush1.msra.mxu0 0.0
    %807 = vmatprep.subr.mxu0 0.0
    %808 = vmatpush1.msra.mxu0 0.0
    %809 = vmatprep.subr.mxu0 0.0
    %810 = vmatpush1.msra.mxu0 0.0
    %811 = vmatprep.subr.mxu0 0.0
    %812 = vmatpush1.msra.mxu0 0.0
    %813 = vmatprep.subr.mxu0 0.0
    %814 = vmatpush1.msra.mxu0 0.0
    %815 = vmatprep.subr.mxu0 0.0
    %816 = vmatpush1.msra.mxu0 0.0
    %817 = vmatprep.subr.mxu0 0.0
    %818 = vmatpush1.msra.mxu0 0.0
    %819 = vmatprep.subr.mxu0 0.0
    %820 = vmatpush1.msra.mxu0 0.0
    %821 = vmatprep.subr.mxu0 0.0
    %822 = vmatpush1.msra.mxu0 0.0
    %823 = vmatprep.subr.mxu0 0.0
    %824 = vmatpush1.msra.mxu0 0.0
    %825 = vmatprep.subr.mxu0 0.0
    %826 = vmatpush1.msra.mxu0 0.0
    %827 = vmatprep.subr.mxu0 0.0
    %828 = vmatpush1.msra.mxu0 0.0
    %829 = vmatprep.subr.mxu0 0.0
    %830 = vmatpush1.msra.mxu0 0.0
    %831 = vmatprep.subr.mxu0 0.0
    %832 = vmatpush1.msra.mxu0 0.0
    %833 = vmatprep.subr.mxu0 0.0
    %834 = vmatpush1.msra.mxu0 0.0
    %835 = vmatprep.subr.mxu0 0.0
    %836 = vmatpush1.msra.mxu0 0.0
    %837 = vmatprep.subr.mxu0 0.0
    %838 = vmatpush1.msra.mxu0 0.0
    %839 = vmatprep.subr.mxu0 0.0
    %840 = vmatpush1.msra.mxu0 0.0
    %841 = vmatprep.subr.mxu0 0.0
    %842 = vmatpush1.msra.mxu0 0.0
    %843 = vmatprep.subr.mxu0 0.0
    %844 = vmatpush1.msra.mxu0 0.0
    %845 = vmatprep.subr.mxu0 0.0
    %846 = vmatpush1.msra.mxu0 0.0
    %847 = vmatprep.subr.mxu0 0.0
    %848 = vmatpush1.msra.mxu0 0.0
    %849 = vmatprep.subr.mxu0 0.0
    %850 = vmatpush1.msra.mxu0 0.0
    %851 = vmatprep.subr.mxu0 0.0
    %852 = vmatpush1.msra.mxu0 0.0
    %853 = vmatprep.subr.mxu0 0.0
    %854 = vmatpush1.msra.mxu0 0.0
    %855 = vmatprep.subr.mxu0 0.0
    %856 = vmatpush1.msra.mxu0 0.0
    %857 = vmatprep.subr.mxu0 0.0
    %858 = vmatpush1.msra.mxu0 0.0
    %859 = vmatprep.subr.mxu0 0.0
    %860 = vmatpush1.msra.mxu0 0.0
    %861 = vmatprep.mubr.f32.mxu0 0.0
    %862 = vmatmul.mubr.f32.gmra.mrb[0].mxu0 %v792
    %v863 = vpop.f32.mrb[0].mxu0
    %v864 = vadd.f32 %v789, %v863
    %v865 = vpop.f32.mrb[0].mxu0
    %866 = vmatprep.mubr.f32.mxu0 0.0
    %867 = vmatmul.mubr.f32.gmra.mrb[0].mxu0 %v795
    %v868 = vpop.f32.mrb[0].mxu0
    %v869 = vadd.f32 %v789, %v868
    %v870 = vpop.f32.mrb[0].mxu0
    %871 = vdwg.mxu0
    %vm872 = vcmask 64512
    %873 = vst.msk [vmem:[%s5] sm:$0xff] %vm872, %v864
    %874 = vst.msk [vmem:[%s5 + $0x8] sm:$0xff] %vm872, %v869
    // Predicated region
    $region30: #{tpu_custom_call.1} parent=1 // pred_check
      _
    $region31: #{tpu_custom_call.1} parent=1 // pred_check_branch
      %876 = sbr.rel (0) target = $region33
    $region32: #{tpu_custom_call.1} parent=1 // pred_region
      _
    $region33: #{tpu_custom_call.1} parent=1 // pred_fallthru
      _
    // Predicated region
    $region34: #{tpu_custom_call.1} parent=1 // pred_check
      _
    $region35: #{tpu_custom_call.1} parent=1 // pred_check_branch
      %878 = sbr.rel (0) target = $region37
    $region36: #{tpu_custom_call.1} parent=1 // pred_region
      _
    $region37: #{tpu_custom_call.1} parent=1 // pred_fallthru
      _
    %879 = vsyncpa [#allocation4], 1
    %880 = vsyncpa [#allocation6], 1

</llo_original>
